<compile_context>
chip_gen: v5e
topology: v5e:2x2
jax: 0.10.0
libtpu: 0.0.40
codegen_flags: <defaults>
</compile_context>

<pallas_src>
import functools

import jax
import jax.numpy as jnp
from jax.experimental import pallas as pl
from jax.experimental.pallas import tpu as pltpu

LANE = 128  # vreg lane width; batch tiles are multiples of this.


def mlp_kernel(x_ref, w1_ref, b1_ref, w2_ref, b2_ref, w3_ref, b3_ref, o_ref):
    x = x_ref[...]  # (4, TB)  -- batch on the lane axis

    def mac(w, b, h):
        # h: (in_dim, TB); w: (out_dim, in_dim); b: (out_dim, 1)
        # Statically unrolled VPU multiply-accumulate over the tiny contraction dim.
        out_dim, in_dim = w.shape
        acc = jnp.broadcast_to(b, (out_dim, h.shape[-1]))  # hoisted bias broadcast
        for k in range(in_dim):  # K in {4, 10, 5}: static unroll, stays in vregs
            acc = acc + w[:, k:k + 1] * h[k:k + 1, :]
        return acc

    # fc1 + relu : (10, TB)
    h1 = jnp.maximum(mac(w1_ref[...], b1_ref[...], x), 0.0)
    # fc2 + relu : (5, TB)
    h2 = jnp.maximum(mac(w2_ref[...], b2_ref[...], h1), 0.0)
    # fc3 (no activation) : (3, TB), lane-dense store
    o_ref[...] = mac(w3_ref[...], b3_ref[...], h2).astype(o_ref.dtype)


def mlp_forward(x, params, *, tile_b=None):
    """x: (B, 4) float32 (PyTorch layout). params: w1,b1,w2,b2,w3,b3 in nn.Linear shapes."""
    B, f_in = x.shape
    assert f_in == 4
    w1, b1 = params["w1"], params["b1"]   # (10, 4), (10, 1)
    w2, b2 = params["w2"], params["b2"]   # (5, 10), (5, 1)
    w3, b3 = params["w3"], params["b3"]   # (3, 5),  (3, 1)

    # Large, lane-aligned batch tiles: good HBM pipelining and (grid >= 2 when B is
    # large) megacore sharding via the "parallel" grid axis.
    if tile_b is None:
        tile_b = min(512, pl.cdiv(B, LANE) * LANE)
    assert tile_b % LANE == 0, "tile_b must be a multiple of 128 lanes"

    padded_b = pl.cdiv(B, tile_b) * tile_b
    xt = x.T  # (4, B): batch on the last (lane) axis
    if padded_b != B:
        xt = jnp.pad(xt, ((0, 0), (0, padded_b - B)))

    grid = (padded_b // tile_b,)

    def replicated(arr):
        # Full weight/bias block; same block index every grid step -> DMA'd once,
        # resident in VMEM across the whole grid.
        return pl.BlockSpec(arr.shape, lambda i: (0, 0))

    weight_bytes = sum(int(a.size) * 4 for a in (w1, b1, w2, b2, w3, b3))
    cost = pl.CostEstimate(
        flops=2 * padded_b * (4 * 10 + 10 * 5 + 5 * 3),
        transcendentals=0,
        bytes_accessed=padded_b * (4 + 3) * 4 + weight_bytes,
    )

    out_t = pl.pallas_call(
        mlp_kernel,
        out_shape=jax.ShapeDtypeStruct((3, padded_b), jnp.float32),
        grid_spec=pltpu.PrefetchScalarGridSpec(
            num_scalar_prefetch=0,
            grid=grid,
            in_specs=[
                pl.BlockSpec((4, tile_b), lambda i: (0, i)),   # x tile, batch on lanes
                replicated(w1), replicated(b1),
                replicated(w2), replicated(b2),
                replicated(w3), replicated(b3),
            ],
            out_specs=pl.BlockSpec((3, tile_b), lambda i: (0, i)),
        ),
        compiler_params=pltpu.CompilerParams(
            dimension_semantics=("parallel",)),
        cost_estimate=cost,
    )(xt, w1, b1, w2, b2, w3, b3)           # (3, padded_b)

    return out_t[:, :B].T                    # back to PyTorch layout (B, 3)


def init_params(key):
    """Deterministic init mimicking PyTorch Linear default U(-1/sqrt(fan_in), +).

    Weights are stored in PyTorch shape (out_features, in_features); biases as (out, 1).
    """
    dims = [(4, 10), (10, 5), (5, 3)]
    params = {}
    for idx, (fan_in, fan_out) in enumerate(dims, start=1):
        key, kw, kb = jax.random.split(key, 3)
        bound = 1.0 / jnp.sqrt(fan_in)
        params[f"w{idx}"] = jax.random.uniform(
            kw, (fan_out, fan_in), jnp.float32, -bound, bound)
        params[f"b{idx}"] = jax.random.uniform(
            kb, (fan_out, 1), jnp.float32, -bound, bound)
    return params


def _reference(x, params):
    hi = jax.lax.Precision.HIGHEST
    h = jnp.maximum(
        jnp.dot(x, params["w1"].T, precision=hi) + params["b1"].T, 0.0)
    h = jnp.maximum(
        jnp.dot(h, params["w2"].T, precision=hi) + params["b2"].T, 0.0)
    return jnp.dot(h, params["w3"].T, precision=hi) + params["b3"].T


if __name__ == "__main__":
    key = jax.random.PRNGKey(0)
    key, kx = jax.random.split(key)
    B = 8
    x = jax.random.normal(kx, (B, 4), jnp.float32)
    params = init_params(key)

    run = jax.jit(functools.partial(mlp_forward, params=params))
    out = jax.block_until_ready(run(x))

    ref = _reference(x, params)
    assert out.shape == (B, 3)
    assert jnp.allclose(out, ref, atol=1e-5, rtol=1e-5), (
        f"max abs err {jnp.max(jnp.abs(out - ref))}")

    print("KERNEL_OK")
</pallas_src>

<mosaic_0001>
module attributes {stable_mosaic.version = 11 : i64} {
  func.func @mlp_kernel(%arg0: i32, %arg1: memref<4x128xf32, #tpu.memory_space<vmem>>, %arg2: memref<10x4xf32, #tpu.memory_space<vmem>>, %arg3: memref<10x1xf32, #tpu.memory_space<vmem>>, %arg4: memref<5x10xf32, #tpu.memory_space<vmem>>, %arg5: memref<5x1xf32, #tpu.memory_space<vmem>>, %arg6: memref<3x5xf32, #tpu.memory_space<vmem>>, %arg7: memref<3x1xf32, #tpu.memory_space<vmem>>, %arg8: memref<3x128xf32, #tpu.memory_space<vmem>>) attributes {dimension_semantics = [#tpu.dimension_semantics<parallel>], iteration_bounds = array<i64: 1>, scalar_prefetch = 0 : i64, scratch_operands = 0 : i64, tpu.core_type = #tpu.core_type<tc>, window_params = [{transform_indices = @transform_0, window_bounds = array<i64: 4, 128>}, {pipeline_mode = #tpu.pipeline_mode<synchronous>, transform_indices = @transform_1, window_bounds = array<i64: 10, 4>}, {pipeline_mode = #tpu.pipeline_mode<synchronous>, transform_indices = @transform_2, window_bounds = array<i64: 10, 1>}, {pipeline_mode = #tpu.pipeline_mode<synchronous>, transform_indices = @transform_3, window_bounds = array<i64: 5, 10>}, {pipeline_mode = #tpu.pipeline_mode<synchronous>, transform_indices = @transform_4, window_bounds = array<i64: 5, 1>}, {pipeline_mode = #tpu.pipeline_mode<synchronous>, transform_indices = @transform_5, window_bounds = array<i64: 3, 5>}, {pipeline_mode = #tpu.pipeline_mode<synchronous>, transform_indices = @transform_6, window_bounds = array<i64: 3, 1>}, {transform_indices = @transform_7, window_bounds = array<i64: 3, 128>}]} {
    %c0 = arith.constant 0 : index
    %c0_0 = arith.constant 0 : index
    %0 = vector.load %arg1[%c0, %c0_0] : memref<4x128xf32, #tpu.memory_space<vmem>>, vector<4x128xf32>
    %c0_1 = arith.constant 0 : index
    %c0_2 = arith.constant 0 : index
    %1 = vector.load %arg2[%c0_1, %c0_2] : memref<10x4xf32, #tpu.memory_space<vmem>>, vector<10x4xf32>
    %c0_3 = arith.constant 0 : index
    %c0_4 = arith.constant 0 : index
    %2 = vector.load %arg3[%c0_3, %c0_4] : memref<10x1xf32, #tpu.memory_space<vmem>>, vector<10x1xf32>
    %3 = vector.shape_cast %2 : vector<10x1xf32> to vector<10x1xf32>
    %4 = vector.broadcast %3 : vector<10x1xf32> to vector<10x128xf32>
    %5 = vector.extract_strided_slice %1 {offsets = [0, 0], sizes = [10, 1], strides = [1, 1]} : vector<10x4xf32> to vector<10x1xf32>
    %6 = vector.extract_strided_slice %0 {offsets = [0, 0], sizes = [1, 128], strides = [1, 1]} : vector<4x128xf32> to vector<1x128xf32>
    %7 = vector.broadcast %5 : vector<10x1xf32> to vector<10x128xf32>
    %8 = vector.broadcast %6 : vector<1x128xf32> to vector<10x128xf32>
    %9 = arith.mulf %7, %8 : vector<10x128xf32>
    %10 = arith.addf %4, %9 : vector<10x128xf32>
    %11 = vector.extract_strided_slice %1 {offsets = [0, 1], sizes = [10, 1], strides = [1, 1]} : vector<10x4xf32> to vector<10x1xf32>
    %12 = vector.extract_strided_slice %0 {offsets = [1, 0], sizes = [1, 128], strides = [1, 1]} : vector<4x128xf32> to vector<1x128xf32>
    %13 = vector.broadcast %11 : vector<10x1xf32> to vector<10x128xf32>
    %14 = vector.broadcast %12 : vector<1x128xf32> to vector<10x128xf32>
    %15 = arith.mulf %13, %14 : vector<10x128xf32>
    %16 = arith.addf %10, %15 : vector<10x128xf32>
    %17 = vector.extract_strided_slice %1 {offsets = [0, 2], sizes = [10, 1], strides = [1, 1]} : vector<10x4xf32> to vector<10x1xf32>
    %18 = vector.extract_strided_slice %0 {offsets = [2, 0], sizes = [1, 128], strides = [1, 1]} : vector<4x128xf32> to vector<1x128xf32>
    %19 = vector.broadcast %17 : vector<10x1xf32> to vector<10x128xf32>
    %20 = vector.broadcast %18 : vector<1x128xf32> to vector<10x128xf32>
    %21 = arith.mulf %19, %20 : vector<10x128xf32>
    %22 = arith.addf %16, %21 : vector<10x128xf32>
    %23 = vector.extract_strided_slice %1 {offsets = [0, 3], sizes = [10, 1], strides = [1, 1]} : vector<10x4xf32> to vector<10x1xf32>
    %24 = vector.extract_strided_slice %0 {offsets = [3, 0], sizes = [1, 128], strides = [1, 1]} : vector<4x128xf32> to vector<1x128xf32>
    %25 = vector.broadcast %23 : vector<10x1xf32> to vector<10x128xf32>
    %26 = vector.broadcast %24 : vector<1x128xf32> to vector<10x128xf32>
    %27 = arith.mulf %25, %26 : vector<10x128xf32>
    %28 = arith.addf %22, %27 : vector<10x128xf32>
    %cst = arith.constant 0.000000e+00 : f32
    %29 = vector.broadcast %cst : f32 to vector<10x128xf32>
    %30 = arith.maximumf %28, %29 : vector<10x128xf32>
    %c0_5 = arith.constant 0 : index
    %c0_6 = arith.constant 0 : index
    %31 = vector.load %arg4[%c0_5, %c0_6] : memref<5x10xf32, #tpu.memory_space<vmem>>, vector<5x10xf32>
    %c0_7 = arith.constant 0 : index
    %c0_8 = arith.constant 0 : index
    %32 = vector.load %arg5[%c0_7, %c0_8] : memref<5x1xf32, #tpu.memory_space<vmem>>, vector<5x1xf32>
    %33 = vector.shape_cast %32 : vector<5x1xf32> to vector<5x1xf32>
    %34 = vector.broadcast %33 : vector<5x1xf32> to vector<5x128xf32>
    %35 = vector.extract_strided_slice %31 {offsets = [0, 0], sizes = [5, 1], strides = [1, 1]} : vector<5x10xf32> to vector<5x1xf32>
    %36 = vector.extract_strided_slice %30 {offsets = [0, 0], sizes = [1, 128], strides = [1, 1]} : vector<10x128xf32> to vector<1x128xf32>
    %37 = vector.broadcast %35 : vector<5x1xf32> to vector<5x128xf32>
    %38 = vector.broadcast %36 : vector<1x128xf32> to vector<5x128xf32>
    %39 = arith.mulf %37, %38 : vector<5x128xf32>
    %40 = arith.addf %34, %39 : vector<5x128xf32>
    %41 = vector.extract_strided_slice %31 {offsets = [0, 1], sizes = [5, 1], strides = [1, 1]} : vector<5x10xf32> to vector<5x1xf32>
    %42 = vector.extract_strided_slice %30 {offsets = [1, 0], sizes = [1, 128], strides = [1, 1]} : vector<10x128xf32> to vector<1x128xf32>
    %43 = vector.broadcast %41 : vector<5x1xf32> to vector<5x128xf32>
    %44 = vector.broadcast %42 : vector<1x128xf32> to vector<5x128xf32>
    %45 = arith.mulf %43, %44 : vector<5x128xf32>
    %46 = arith.addf %40, %45 : vector<5x128xf32>
    %47 = vector.extract_strided_slice %31 {offsets = [0, 2], sizes = [5, 1], strides = [1, 1]} : vector<5x10xf32> to vector<5x1xf32>
    %48 = vector.extract_strided_slice %30 {offsets = [2, 0], sizes = [1, 128], strides = [1, 1]} : vector<10x128xf32> to vector<1x128xf32>
    %49 = vector.broadcast %47 : vector<5x1xf32> to vector<5x128xf32>
    %50 = vector.broadcast %48 : vector<1x128xf32> to vector<5x128xf32>
    %51 = arith.mulf %49, %50 : vector<5x128xf32>
    %52 = arith.addf %46, %51 : vector<5x128xf32>
    %53 = vector.extract_strided_slice %31 {offsets = [0, 3], sizes = [5, 1], strides = [1, 1]} : vector<5x10xf32> to vector<5x1xf32>
    %54 = vector.extract_strided_slice %30 {offsets = [3, 0], sizes = [1, 128], strides = [1, 1]} : vector<10x128xf32> to vector<1x128xf32>
    %55 = vector.broadcast %53 : vector<5x1xf32> to vector<5x128xf32>
    %56 = vector.broadcast %54 : vector<1x128xf32> to vector<5x128xf32>
    %57 = arith.mulf %55, %56 : vector<5x128xf32>
    %58 = arith.addf %52, %57 : vector<5x128xf32>
    %59 = vector.extract_strided_slice %31 {offsets = [0, 4], sizes = [5, 1], strides = [1, 1]} : vector<5x10xf32> to vector<5x1xf32>
    %60 = vector.extract_strided_slice %30 {offsets = [4, 0], sizes = [1, 128], strides = [1, 1]} : vector<10x128xf32> to vector<1x128xf32>
    %61 = vector.broadcast %59 : vector<5x1xf32> to vector<5x128xf32>
    %62 = vector.broadcast %60 : vector<1x128xf32> to vector<5x128xf32>
    %63 = arith.mulf %61, %62 : vector<5x128xf32>
    %64 = arith.addf %58, %63 : vector<5x128xf32>
    %65 = vector.extract_strided_slice %31 {offsets = [0, 5], sizes = [5, 1], strides = [1, 1]} : vector<5x10xf32> to vector<5x1xf32>
    %66 = vector.extract_strided_slice %30 {offsets = [5, 0], sizes = [1, 128], strides = [1, 1]} : vector<10x128xf32> to vector<1x128xf32>
    %67 = vector.broadcast %65 : vector<5x1xf32> to vector<5x128xf32>
    %68 = vector.broadcast %66 : vector<1x128xf32> to vector<5x128xf32>
    %69 = arith.mulf %67, %68 : vector<5x128xf32>
    %70 = arith.addf %64, %69 : vector<5x128xf32>
    %71 = vector.extract_strided_slice %31 {offsets = [0, 6], sizes = [5, 1], strides = [1, 1]} : vector<5x10xf32> to vector<5x1xf32>
    %72 = vector.extract_strided_slice %30 {offsets = [6, 0], sizes = [1, 128], strides = [1, 1]} : vector<10x128xf32> to vector<1x128xf32>
    %73 = vector.broadcast %71 : vector<5x1xf32> to vector<5x128xf32>
    %74 = vector.broadcast %72 : vector<1x128xf32> to vector<5x128xf32>
    %75 = arith.mulf %73, %74 : vector<5x128xf32>
    %76 = arith.addf %70, %75 : vector<5x128xf32>
    %77 = vector.extract_strided_slice %31 {offsets = [0, 7], sizes = [5, 1], strides = [1, 1]} : vector<5x10xf32> to vector<5x1xf32>
    %78 = vector.extract_strided_slice %30 {offsets = [7, 0], sizes = [1, 128], strides = [1, 1]} : vector<10x128xf32> to vector<1x128xf32>
    %79 = vector.broadcast %77 : vector<5x1xf32> to vector<5x128xf32>
    %80 = vector.broadcast %78 : vector<1x128xf32> to vector<5x128xf32>
    %81 = arith.mulf %79, %80 : vector<5x128xf32>
    %82 = arith.addf %76, %81 : vector<5x128xf32>
    %83 = vector.extract_strided_slice %31 {offsets = [0, 8], sizes = [5, 1], strides = [1, 1]} : vector<5x10xf32> to vector<5x1xf32>
    %84 = vector.extract_strided_slice %30 {offsets = [8, 0], sizes = [1, 128], strides = [1, 1]} : vector<10x128xf32> to vector<1x128xf32>
    %85 = vector.broadcast %83 : vector<5x1xf32> to vector<5x128xf32>
    %86 = vector.broadcast %84 : vector<1x128xf32> to vector<5x128xf32>
    %87 = arith.mulf %85, %86 : vector<5x128xf32>
    %88 = arith.addf %82, %87 : vector<5x128xf32>
    %89 = vector.extract_strided_slice %31 {offsets = [0, 9], sizes = [5, 1], strides = [1, 1]} : vector<5x10xf32> to vector<5x1xf32>
    %90 = vector.extract_strided_slice %30 {offsets = [9, 0], sizes = [1, 128], strides = [1, 1]} : vector<10x128xf32> to vector<1x128xf32>
    %91 = vector.broadcast %89 : vector<5x1xf32> to vector<5x128xf32>
    %92 = vector.broadcast %90 : vector<1x128xf32> to vector<5x128xf32>
    %93 = arith.mulf %91, %92 : vector<5x128xf32>
    %94 = arith.addf %88, %93 : vector<5x128xf32>
    %cst_9 = arith.constant 0.000000e+00 : f32
    %95 = vector.broadcast %cst_9 : f32 to vector<5x128xf32>
    %96 = arith.maximumf %94, %95 : vector<5x128xf32>
    %c0_10 = arith.constant 0 : index
    %c0_11 = arith.constant 0 : index
    %97 = vector.load %arg6[%c0_10, %c0_11] : memref<3x5xf32, #tpu.memory_space<vmem>>, vector<3x5xf32>
    %c0_12 = arith.constant 0 : index
    %c0_13 = arith.constant 0 : index
    %98 = vector.load %arg7[%c0_12, %c0_13] : memref<3x1xf32, #tpu.memory_space<vmem>>, vector<3x1xf32>
    %99 = vector.shape_cast %98 : vector<3x1xf32> to vector<3x1xf32>
    %100 = vector.broadcast %99 : vector<3x1xf32> to vector<3x128xf32>
    %101 = vector.extract_strided_slice %97 {offsets = [0, 0], sizes = [3, 1], strides = [1, 1]} : vector<3x5xf32> to vector<3x1xf32>
    %102 = vector.extract_strided_slice %96 {offsets = [0, 0], sizes = [1, 128], strides = [1, 1]} : vector<5x128xf32> to vector<1x128xf32>
    %103 = vector.broadcast %101 : vector<3x1xf32> to vector<3x128xf32>
    %104 = vector.broadcast %102 : vector<1x128xf32> to vector<3x128xf32>
    %105 = arith.mulf %103, %104 : vector<3x128xf32>
    %106 = arith.addf %100, %105 : vector<3x128xf32>
    %107 = vector.extract_strided_slice %97 {offsets = [0, 1], sizes = [3, 1], strides = [1, 1]} : vector<3x5xf32> to vector<3x1xf32>
    %108 = vector.extract_strided_slice %96 {offsets = [1, 0], sizes = [1, 128], strides = [1, 1]} : vector<5x128xf32> to vector<1x128xf32>
    %109 = vector.broadcast %107 : vector<3x1xf32> to vector<3x128xf32>
    %110 = vector.broadcast %108 : vector<1x128xf32> to vector<3x128xf32>
    %111 = arith.mulf %109, %110 : vector<3x128xf32>
    %112 = arith.addf %106, %111 : vector<3x128xf32>
    %113 = vector.extract_strided_slice %97 {offsets = [0, 2], sizes = [3, 1], strides = [1, 1]} : vector<3x5xf32> to vector<3x1xf32>
    %114 = vector.extract_strided_slice %96 {offsets = [2, 0], sizes = [1, 128], strides = [1, 1]} : vector<5x128xf32> to vector<1x128xf32>
    %115 = vector.broadcast %113 : vector<3x1xf32> to vector<3x128xf32>
    %116 = vector.broadcast %114 : vector<1x128xf32> to vector<3x128xf32>
    %117 = arith.mulf %115, %116 : vector<3x128xf32>
    %118 = arith.addf %112, %117 : vector<3x128xf32>
    %119 = vector.extract_strided_slice %97 {offsets = [0, 3], sizes = [3, 1], strides = [1, 1]} : vector<3x5xf32> to vector<3x1xf32>
    %120 = vector.extract_strided_slice %96 {offsets = [3, 0], sizes = [1, 128], strides = [1, 1]} : vector<5x128xf32> to vector<1x128xf32>
    %121 = vector.broadcast %119 : vector<3x1xf32> to vector<3x128xf32>
    %122 = vector.broadcast %120 : vector<1x128xf32> to vector<3x128xf32>
    %123 = arith.mulf %121, %122 : vector<3x128xf32>
    %124 = arith.addf %118, %123 : vector<3x128xf32>
    %125 = vector.extract_strided_slice %97 {offsets = [0, 4], sizes = [3, 1], strides = [1, 1]} : vector<3x5xf32> to vector<3x1xf32>
    %126 = vector.extract_strided_slice %96 {offsets = [4, 0], sizes = [1, 128], strides = [1, 1]} : vector<5x128xf32> to vector<1x128xf32>
    %127 = vector.broadcast %125 : vector<3x1xf32> to vector<3x128xf32>
    %128 = vector.broadcast %126 : vector<1x128xf32> to vector<3x128xf32>
    %129 = arith.mulf %127, %128 : vector<3x128xf32>
    %130 = arith.addf %124, %129 : vector<3x128xf32>
    %c0_14 = arith.constant 0 : index
    %c0_15 = arith.constant 0 : index
    %131 = vector.load %arg8[%c0_14, %c0_15] : memref<3x128xf32, #tpu.memory_space<vmem>>, vector<3x128xf32>
    tpu.vector_store %arg8[%c0_14, %c0_15], %130 {strides = array<i32>} : memref<3x128xf32, #tpu.memory_space<vmem>>, vector<3x128xf32>,
    return
  }
  func.func @transform_0(%arg0: i32) -> (i32, i32) {
    %c0_i32 = arith.constant 0 : i32
    %c0_i32_0 = arith.constant 0 : i32
    return %c0_i32, %arg0 : i32, i32
  }
  func.func @transform_1(%arg0: i32) -> (i32, i32) {
    %c0_i32 = arith.constant 0 : i32
    %c0_i32_0 = arith.constant 0 : i32
    %c0_i32_1 = arith.constant 0 : i32
    return %c0_i32, %c0_i32_0 : i32, i32
  }
  func.func @transform_2(%arg0: i32) -> (i32, i32) {
    %c0_i32 = arith.constant 0 : i32
    %c0_i32_0 = arith.constant 0 : i32
    %c0_i32_1 = arith.constant 0 : i32
    return %c0_i32, %c0_i32_0 : i32, i32
  }
  func.func @transform_3(%arg0: i32) -> (i32, i32) {
    %c0_i32 = arith.constant 0 : i32
    %c0_i32_0 = arith.constant 0 : i32
    %c0_i32_1 = arith.constant 0 : i32
    return %c0_i32, %c0_i32_0 : i32, i32
  }
  func.func @transform_4(%arg0: i32) -> (i32, i32) {
    %c0_i32 = arith.constant 0 : i32
    %c0_i32_0 = arith.constant 0 : i32
    %c0_i32_1 = arith.constant 0 : i32
    return %c0_i32, %c0_i32_0 : i32, i32
  }
  func.func @transform_5(%arg0: i32) -> (i32, i32) {
    %c0_i32 = arith.constant 0 : i32
    %c0_i32_0 = arith.constant 0 : i32
    %c0_i32_1 = arith.constant 0 : i32
    return %c0_i32, %c0_i32_0 : i32, i32
  }
  func.func @transform_6(%arg0: i32) -> (i32, i32) {
    %c0_i32 = arith.constant 0 : i32
    %c0_i32_0 = arith.constant 0 : i32
    %c0_i32_1 = arith.constant 0 : i32
    return %c0_i32, %c0_i32_0 : i32, i32
  }
  func.func @transform_7(%arg0: i32) -> (i32, i32) {
    %c0_i32 = arith.constant 0 : i32
    %c0_i32_0 = arith.constant 0 : i32
    return %c0_i32, %arg0 : i32, i32
  }
}

</mosaic_0001>

<llo_original>
// kernel: mlp_forward.1
$region0: #{mlp_forward.1}
  #allocation0 [shape = 'u32[]', space=smem, size = 0x4, offset = 0x4, fixed_abs, tag = 'smem constant byte address 0x4 - core index']
  #allocation1 [shape = 'u32[72,128]{1,0:T(1,128)}', space=vmem, size = 0x9000, scoped, tag = 'internal scratch']
  %s0 = inlined_call_operand.vmem [shape: f32[4,128], index: 0, kind: input, shape index: {}]
  %s1 = inlined_call_operand.hbm [shape: f32[10,4], index: 1, kind: input, shape index: {}]
  %s2 = inlined_call_operand.hbm [shape: f32[10,1], index: 2, kind: input, shape index: {}]
  %s3 = inlined_call_operand.hbm [shape: f32[5,10], index: 3, kind: input, shape index: {}]
  %s4 = inlined_call_operand.vmem [shape: f32[5,1], index: 4, kind: input, shape index: {}]
  %s5 = inlined_call_operand.hbm [shape: f32[3,5], index: 5, kind: input, shape index: {}]
  %s6 = inlined_call_operand.vmem [shape: f32[3,1], index: 6, kind: input, shape index: {}]
  %s7 = inlined_call_operand.vmem [shape: f32[3,128], index: 7, kind: output, shape index: {}]
  %s8 = sld [smem:[#allocation0]]
  $region54: #{mlp_forward.1} parent=0
    _
  %s10 = ssub.s32 1, %s8
  %s11 = scalar_select 0, %s10, %s8
  $region1: #{mlp_forward.1} parent=0
    #allocation2 [shape = 'u8[8192]{0}', space=vmem, size = 0x2000, scoped, tag = 'input window, operand 1, single buffered']
    #allocation3 [shape = 's32[1]{0}', space=sflag, size = 0x4, scoped, tag = 'scoped memory for mlp_forward.1']
    #allocation4 [shape = 'u8[8192]{0}', space=vmem, size = 0x2000, scoped, tag = 'input window, operand 2, single buffered']
    #allocation5 [shape = 's32[1]{0}', space=sflag, size = 0x4, scoped, tag = 'scoped memory for mlp_forward.1']
    #allocation6 [shape = 'u8[4096]{0}', space=vmem, size = 0x1000, scoped, tag = 'input window, operand 3, single buffered']
    #allocation7 [shape = 'u8[2048]{0}', space=vmem, size = 0x800, scoped, tag = 'input window, operand 5, single buffered']
    #allocation8 [shape = 's32[1]{0}', space=sflag, size = 0x4, scoped, tag = 'scoped memory for mlp_forward.1']
    %12 = vsyncpa [#allocation3], 0
    %13 = vsyncpa [#allocation5], 0
    %14 = vsyncpa [#allocation8], 0
    // Predicated region
    $region2: #{mlp_forward.1} parent=1 // pred_check
      _
    $region3: #{mlp_forward.1} parent=1 // pred_check_branch
      %16 = sbr.rel (0) target = $region5
    $region4: #{mlp_forward.1} parent=1 // pred_region
      _
    $region5: #{mlp_forward.1} parent=1 // pred_fallthru
      _
    // Predicated region
    $region6: #{mlp_forward.1} parent=1 // pred_check
      _
    $region7: #{mlp_forward.1} parent=1 // pred_check_branch
      %18 = sbr.rel (0) target = $region9
    $region8: #{mlp_forward.1} parent=1 // pred_region
      %20 = vsyncadd [#allocation3], 0
      %s21 = sshll.u32 %s1, 4
      %s22 = int_to_ptr.hbm [resolvable:$true] %s21
      %s23 = sshll.u32 [#allocation2], 4
      %s24 = int_to_ptr.vmem [resolvable:$true] %s23
      %29 = dma.hbm_to_vmem [thread:$0]  %s22, 256, %s24, [#allocation3], 128, 128, 8
    $region9: #{mlp_forward.1} parent=1 // pred_fallthru
      _
    // Predicated region
    $region10: #{mlp_forward.1} parent=1 // pred_check
      _
    $region11: #{mlp_forward.1} parent=1 // pred_check_branch
      %31 = sbr.rel (0) target = $region13
    $region12: #{mlp_forward.1} parent=1 // pred_region
      %33 = vsyncadd [#allocation5], 0
      %s34 = sshll.u32 %s2, 4
      %s35 = int_to_ptr.hbm [resolvable:$true] %s34
      %s36 = sshll.u32 [#allocation4], 4
      %s37 = int_to_ptr.vmem [resolvable:$true] %s36
      %42 = dma.hbm_to_vmem [thread:$0]  %s35, 256, %s37, [#allocation5], 128, 128, 8
    $region13: #{mlp_forward.1} parent=1 // pred_fallthru
      _
    // Predicated region
    $region14: #{mlp_forward.1} parent=1 // pred_check
      _
    $region15: #{mlp_forward.1} parent=1 // pred_check_branch
      %44 = sbr.rel (0) target = $region17
    $region16: #{mlp_forward.1} parent=1 // pred_region
      %46 = vsyncadd [#allocation5], 0
      %s48 = sshll.u32 %s3, 4
      %s49 = int_to_ptr.hbm [resolvable:$true] %s48
      %s50 = sshll.u32 [#allocation6], 4
      %s51 = int_to_ptr.vmem [resolvable:$true] %s50
      %53 = dma.hbm_to_vmem [thread:$0]  %s49, 128, %s51, [#allocation5]
    $region17: #{mlp_forward.1} parent=1 // pred_fallthru
      _
    // Predicated region
    $region18: #{mlp_forward.1} parent=1 // pred_check
      _
    $region19: #{mlp_forward.1} parent=1 // pred_check_branch
      %55 = sbr.rel (0) target = $region21
    $region20: #{mlp_forward.1} parent=1 // pred_region
      _
    $region21: #{mlp_forward.1} parent=1 // pred_fallthru
      _
    // Predicated region
    $region22: #{mlp_forward.1} parent=1 // pred_check
      _
    $region23: #{mlp_forward.1} parent=1 // pred_check_branch
      %57 = sbr.rel (0) target = $region25
    $region24: #{mlp_forward.1} parent=1 // pred_region
      %59 = vsyncadd [#allocation8], 0
      %s61 = sshll.u32 %s5, 4
      %s62 = int_to_ptr.hbm [resolvable:$true] %s61
      %s63 = sshll.u32 [#allocation7], 4
      %s64 = int_to_ptr.vmem [resolvable:$true] %s63
      %66 = dma.hbm_to_vmem [thread:$0]  %s62, 64, %s64, [#allocation8]
    $region25: #{mlp_forward.1} parent=1 // pred_fallthru
      _
    // Predicated region
    $region26: #{mlp_forward.1} parent=1 // pred_check
      _
    $region27: #{mlp_forward.1} parent=1 // pred_check_branch
      %68 = sbr.rel (0) target = $region29
    $region28: #{mlp_forward.1} parent=1 // pred_region
      _
    $region29: #{mlp_forward.1} parent=1 // pred_fallthru
      _
    // Predicated region
    $region30: #{mlp_forward.1} parent=1 // pred_check
      _
    $region31: #{mlp_forward.1} parent=1 // pred_check_branch
      %70 = sbr.rel (0) target = $region33
    $region32: #{mlp_forward.1} parent=1 // pred_region
      %72 = dma.done [#allocation3], 256
    $region33: #{mlp_forward.1} parent=1 // pred_fallthru
      _
    // Predicated region
    $region34: #{mlp_forward.1} parent=1 // pred_check
      _
    $region35: #{mlp_forward.1} parent=1 // pred_check_branch
      %74 = sbr.rel (0) target = $region37
    $region36: #{mlp_forward.1} parent=1 // pred_region
      %76 = dma.done [#allocation5], 256
    $region37: #{mlp_forward.1} parent=1 // pred_fallthru
      _
    // Predicated region
    $region38: #{mlp_forward.1} parent=1 // pred_check
      _
    $region39: #{mlp_forward.1} parent=1 // pred_check_branch
      %78 = sbr.rel (0) target = $region41
    $region40: #{mlp_forward.1} parent=1 // pred_region
      %80 = dma.done [#allocation5], 128
    $region41: #{mlp_forward.1} parent=1 // pred_fallthru
      _
    // Predicated region
    $region42: #{mlp_forward.1} parent=1 // pred_check
      _
    $region43: #{mlp_forward.1} parent=1 // pred_check_branch
      %82 = sbr.rel (0) target = $region45
    $region44: #{mlp_forward.1} parent=1 // pred_region
      %84 = dma.done [#allocation8], 64
    $region45: #{mlp_forward.1} parent=1 // pred_fallthru
      _
    %v85 = vld [vmem:[%s0] sm:$0xf]
    %v86 = vld [vmem:[#allocation2] sm:$0xff]
    %v87 = vld [vmem:[#allocation2 + $0x8] sm:$0x3]
    %v88 = vld [vmem:[#allocation4] sm:$0xff]
    %v89 = vld [vmem:[#allocation4 + $0x8] sm:$0x3]
    %91 = vset.pattern.permute.xlu0 0
    %92 = vperm.xlu0 %91, %v88
    %v93 = vpop.permute.xlu0 %92
    %96 = vset.pattern.permute.xlu0 0
    %97 = vperm.xlu0 %96, %v89
    %v98 = vpop.permute.xlu0 %97
    %101 = vset.pattern.permute.xlu0 0
    %102 = vperm.xlu0 %101, %v86
    %v103 = vpop.permute.xlu0 %102
    %106 = vset.pattern.permute.xlu0 0
    %107 = vperm.xlu0 %106, %v87
    %v108 = vpop.permute.xlu0 %107
    %v110 = vperm.slane %v85, 0
    %v111 = vmul.f32 %v103, %v110
    %v112 = vmul.f32 %v108, %v110
    %v113 = vadd.f32 %v93, %v111
    %v114 = vadd.f32 %v98, %v112
    %115 = vset.pattern.permute.xlu0 1
    %116 = vperm.xlu0 %115, %v86
    %v117 = vpop.permute.xlu0 %116
    %119 = vset.pattern.permute.xlu0 1
    %120 = vperm.xlu0 %119, %v87
    %v121 = vpop.permute.xlu0 %120
    %v123 = vperm.slane %v85, 1
    %v124 = vmul.f32 %v117, %v123
    %v125 = vmul.f32 %v121, %v123
    %v126 = vadd.f32 %v113, %v124
    %v127 = vadd.f32 %v114, %v125
    %128 = vset.pattern.permute.xlu0 2
    %129 = vperm.xlu0 %128, %v86
    %v130 = vpop.permute.xlu0 %129
    %132 = vset.pattern.permute.xlu0 2
    %133 = vperm.xlu0 %132, %v87
    %v134 = vpop.permute.xlu0 %133
    %v136 = vperm.slane %v85, 2
    %v137 = vmul.f32 %v130, %v136
    %v138 = vmul.f32 %v134, %v136
    %v139 = vadd.f32 %v126, %v137
    %v140 = vadd.f32 %v127, %v138
    %141 = vset.pattern.permute.xlu0 3
    %142 = vperm.xlu0 %141, %v86
    %v143 = vpop.permute.xlu0 %142
    %145 = vset.pattern.permute.xlu0 3
    %146 = vperm.xlu0 %145, %v87
    %v147 = vpop.permute.xlu0 %146
    %v149 = vperm.slane %v85, 3
    %v150 = vmul.f32 %v143, %v149
    %v151 = vmul.f32 %v147, %v149
    %v152 = vadd.f32 %v139, %v150
    %v153 = vadd.f32 %v140, %v151
    %v154 = vmax.f32 %v152, 0.0
    %v155 = vmax.f32 %v153, 0.0
    %v156 = vld [vmem:[#allocation6] sm:$0x1f]
    %v157 = vld [vmem:[%s4] sm:$0x1f]
    %159 = vset.pattern.permute.xlu0 0
    %160 = vperm.xlu0 %159, %v157
    %v161 = vpop.permute.xlu0 %160
    %164 = vset.pattern.permute.xlu0 0
    %165 = vperm.xlu0 %164, %v156
    %v166 = vpop.permute.xlu0 %165
    %v168 = vperm.slane %v154, 0
    %v169 = vmul.f32 %v166, %v168
    %v170 = vadd.f32 %v161, %v169
    %171 = vset.pattern.permute.xlu0 1
    %172 = vperm.xlu0 %171, %v156
    %v173 = vpop.permute.xlu0 %172
    %v175 = vperm.slane %v154, 1
    %v176 = vmul.f32 %v173, %v175
    %v177 = vadd.f32 %v170, %v176
    %178 = vset.pattern.permute.xlu0 2
    %179 = vperm.xlu0 %178, %v156
    %v180 = vpop.permute.xlu0 %179
    %v182 = vperm.slane %v154, 2
    %v183 = vmul.f32 %v180, %v182
    %v184 = vadd.f32 %v177, %v183
    %185 = vset.pattern.permute.xlu0 3
    %186 = vperm.xlu0 %185, %v156
    %v187 = vpop.permute.xlu0 %186
    %v189 = vperm.slane %v154, 3
    %v190 = vmul.f32 %v187, %v189
    %v191 = vadd.f32 %v184, %v190
    %192 = vset.pattern.permute.xlu0 4
    %193 = vperm.xlu0 %192, %v156
    %v194 = vpop.permute.xlu0 %193
    %v196 = vperm.slane %v154, 4
    %v197 = vmul.f32 %v194, %v196
    %v198 = vadd.f32 %v191, %v197
    %199 = vset.pattern.permute.xlu0 5
    %200 = vperm.xlu0 %199, %v156
    %v201 = vpop.permute.xlu0 %200
    %v203 = vperm.slane %v154, 5
    %v204 = vmul.f32 %v201, %v203
    %v205 = vadd.f32 %v198, %v204
    %206 = vset.pattern.permute.xlu0 6
    %207 = vperm.xlu0 %206, %v156
    %v208 = vpop.permute.xlu0 %207
    %v210 = vperm.slane %v154, 6
    %v211 = vmul.f32 %v208, %v210
    %v212 = vadd.f32 %v205, %v211
    %213 = vset.pattern.permute.xlu0 7
    %214 = vperm.xlu0 %213, %v156
    %v215 = vpop.permute.xlu0 %214
    %v217 = vperm.slane %v154, 7
    %v218 = vmul.f32 %v215, %v217
    %v219 = vadd.f32 %v212, %v218
    %220 = vset.pattern.permute.xlu0 8
    %221 = vperm.xlu0 %220, %v156
    %v222 = vpop.permute.xlu0 %221
    %v224 = vperm.slane %v155, 0
    %v225 = vmul.f32 %v222, %v224
    %v226 = vadd.f32 %v219, %v225
    %227 = vset.pattern.permute.xlu0 9
    %228 = vperm.xlu0 %227, %v156
    %v229 = vpop.permute.xlu0 %228
    %v231 = vperm.slane %v155, 1
    %v232 = vmul.f32 %v229, %v231
    %v233 = vadd.f32 %v226, %v232
    %v234 = vmax.f32 %v233, 0.0
    %v235 = vld [vmem:[#allocation7] sm:$0x7]
    %v236 = vld [vmem:[%s6] sm:$0x7]
    %238 = vset.pattern.permute.xlu0 0
    %239 = vperm.xlu0 %238, %v236
    %v240 = vpop.permute.xlu0 %239
    %243 = vset.pattern.permute.xlu0 0
    %244 = vperm.xlu0 %243, %v235
    %v245 = vpop.permute.xlu0 %244
    %v247 = vperm.slane %v234, 0
    %v248 = vmul.f32 %v245, %v247
    %v249 = vadd.f32 %v240, %v248
    %250 = vset.pattern.permute.xlu0 1
    %251 = vperm.xlu0 %250, %v235
    %v252 = vpop.permute.xlu0 %251
    %v254 = vperm.slane %v234, 1
    %v255 = vmul.f32 %v252, %v254
    %v256 = vadd.f32 %v249, %v255
    %257 = vset.pattern.permute.xlu0 2
    %258 = vperm.xlu0 %257, %v235
    %v259 = vpop.permute.xlu0 %258
    %v261 = vperm.slane %v234, 2
    %v262 = vmul.f32 %v259, %v261
    %v263 = vadd.f32 %v256, %v262
    %264 = vset.pattern.permute.xlu0 3
    %265 = vperm.xlu0 %264, %v235
    %v266 = vpop.permute.xlu0 %265
    %v268 = vperm.slane %v234, 3
    %v269 = vmul.f32 %v266, %v268
    %v270 = vadd.f32 %v263, %v269
    %271 = vset.pattern.permute.xlu0 4
    %272 = vperm.xlu0 %271, %v235
    %v273 = vpop.permute.xlu0 %272
    %v275 = vperm.slane %v234, 4
    %v276 = vmul.f32 %v273, %v275
    %v277 = vadd.f32 %v270, %v276
    %278 = vst [vmem:[%s7] sm:$0x7] %v277
    // Predicated region
    $region46: #{mlp_forward.1} parent=1 // pred_check
      _
    $region47: #{mlp_forward.1} parent=1 // pred_check_branch
      %280 = sbr.rel (0) target = $region49
    $region48: #{mlp_forward.1} parent=1 // pred_region
      _
    $region49: #{mlp_forward.1} parent=1 // pred_fallthru
      _
    // Predicated region
    $region50: #{mlp_forward.1} parent=1 // pred_check
      _
    $region51: #{mlp_forward.1} parent=1 // pred_check_branch
      %282 = sbr.rel (0) target = $region53
    $region52: #{mlp_forward.1} parent=1 // pred_region
      _
    $region53: #{mlp_forward.1} parent=1 // pred_fallthru
      _
    %283 = vsyncpa [#allocation3], 1
    %284 = vsyncpa [#allocation5], 1
    %285 = vsyncpa [#allocation8], 1

</llo_original>
